<compile_context>
chip_gen: v5e
topology: v5e:2x2
jax: 0.10.0
libtpu: 0.0.40
codegen_flags: <defaults>
</compile_context>

<pallas_src>
import math

import jax
import jax.numpy as jnp
from jax.experimental import pallas as pl
from jax.experimental.pallas import tpu as pltpu

NUM_DIR = 4
BOARD_HEIGHT = 8
BOARD_WIDTH = 8

INPUT_SIZE = NUM_DIR + 2 * (BOARD_HEIGHT * BOARD_WIDTH)   # 132
HIDDEN_SIZE = INPUT_SIZE                                   # 132
OUTPUT_SIZE = BOARD_HEIGHT * BOARD_WIDTH                   # 64

# Lane-dense (multiple-of-128) padded sizes for the "N" side of each matmul.
HID_PAD = 256   # hidden dim 132 -> 256 (one 256-wide MXU tile on v6e/v7x)
OUT_PAD = 128   # output dim 64 -> 128


def _round_up(n, m):
    return (n + m - 1) // m * m


# --------------------------------------------------------------------------
# Kernel
# --------------------------------------------------------------------------
def dqn_kernel(x_ref, w1_ref, b1_ref, w2_ref, b2_ref, o_ref):
    # x streams as f32 and is cast to bf16 in VMEM (no extra HBM pass).
    x = x_ref[...].astype(jnp.bfloat16)
    # fc1: bf16 operands on the MXU (K = 132, true contraction), f32 accum.
    h = jnp.dot(x, w1_ref[...], preferred_element_type=jnp.float32)
    # Bias + ReLU in f32 (v5e-friendly epilogue).
    h = jnp.maximum(h + b1_ref[...], 0.0)
    # fc2: cast activations to bf16 for the second MXU pass, f32 accum.
    y = jnp.dot(h.astype(jnp.bfloat16), w2_ref[...],
                preferred_element_type=jnp.float32)
    o_ref[...] = (y + b2_ref[...]).astype(o_ref.dtype)


# --------------------------------------------------------------------------
# One-time parameter preparation (hoisted out of the forward path)
# --------------------------------------------------------------------------
def prepare_params(w1_t, b1, w2_t, b2):
    """Pad + cast parameters once. w*_t are [in, out]; b* are [1, out]."""
    # W1: keep K = INPUT_SIZE (132); pad only the hidden (output) dim.
    w1p = jnp.zeros((INPUT_SIZE, HID_PAD), jnp.bfloat16).at[
        :, :HIDDEN_SIZE].set(w1_t.astype(jnp.bfloat16))
    b1p = jnp.zeros((1, HID_PAD), jnp.float32).at[:, :HIDDEN_SIZE].set(
        b1.astype(jnp.float32))
    # W2: padded hidden rows are zero (exact), output dim padded to 128.
    w2p = jnp.zeros((HID_PAD, OUT_PAD), jnp.bfloat16).at[
        :HIDDEN_SIZE, :OUTPUT_SIZE].set(w2_t.astype(jnp.bfloat16))
    b2p = jnp.zeros((1, OUT_PAD), jnp.float32).at[:, :OUTPUT_SIZE].set(
        b2.astype(jnp.float32))
    return w1p, b1p, w2p, b2p


# --------------------------------------------------------------------------
# Tile selection + VMEM budget
# --------------------------------------------------------------------------
def _choose_tile(B, tile_b):
    """Batch tile: minimal (multiple of 8) for tiny B; for larger B, a
    multiple of 256 chosen so the grid has >= 2 tiles (megacore on v7x)."""
    Bu = _round_up(max(B, 8), 8)
    if Bu <= 256:
        return Bu                       # single small tile, minimal padding
    half = _round_up((Bu + 1) // 2, 256)
    return int(min(tile_b, half))       # >= 256, <= tile_b, >= 2 grid tiles


def _vmem_budget_bytes(tb):
    lane = lambda n: _round_up(n, 128)
    x_tile = tb * lane(INPUT_SIZE) * 4 * 2                 # f32, double-buffered
    o_tile = tb * OUT_PAD * 4 * 2                          # f32, double-buffered
    weights = (_round_up(INPUT_SIZE, 16) * HID_PAD * 2     # bf16 W1
               + HID_PAD * OUT_PAD * 2) * 2                # bf16 W2, 2 bufs each
    biases = 8 * (HID_PAD + OUT_PAD) * 4 * 2               # sublane-padded f32
    temps = tb * (lane(INPUT_SIZE) * 2                     # x bf16 copy
                  + HID_PAD * 4 + HID_PAD * 2              # h f32 + h bf16
                  + OUT_PAD * 4)                           # y f32
    total = x_tile + o_tile + weights + biases + temps
    return int(min(max(2 * total, 8 << 20), 32 << 20))     # 2x headroom


# --------------------------------------------------------------------------
# Forward wrapper
# --------------------------------------------------------------------------
def dqn_forward(x, params, *, tile_b=512, return_padded=False):
    """x: [B, INPUT_SIZE] f32; params from prepare_params().
    Returns [B, OUTPUT_SIZE] (or the lane-dense [B, OUT_PAD] block if
    return_padded=True)."""
    w1p, b1p, w2p, b2p = params
    B = x.shape[0]
    out_dtype = x.dtype

    tb = _choose_tile(B, tile_b)
    Bp = _round_up(B, tb)

    # Only batch rows need padding (cheap jnp.pad); features stay at 132 and
    # are consumed directly by the kernel (no cast / feature-pad pre-pass).
    xp = x if Bp == B else jnp.pad(x, ((0, Bp - B), (0, 0)))

    out_padded = pl.pallas_call(
        dqn_kernel,
        out_shape=jax.ShapeDtypeStruct((Bp, OUT_PAD), out_dtype),
        grid_spec=pltpu.PrefetchScalarGridSpec(
            num_scalar_prefetch=0,
            grid=(Bp // tb,),
            in_specs=[
                # x streams per batch tile; last dim == full array dim (132).
                pl.BlockSpec((tb, INPUT_SIZE), lambda i: (i, 0)),
                # Weights / biases: constant block index -> resident in VMEM.
                pl.BlockSpec((INPUT_SIZE, HID_PAD), lambda i: (0, 0)),
                pl.BlockSpec((1, HID_PAD), lambda i: (0, 0)),
                pl.BlockSpec((HID_PAD, OUT_PAD), lambda i: (0, 0)),
                pl.BlockSpec((1, OUT_PAD), lambda i: (0, 0)),
            ],
            out_specs=pl.BlockSpec((tb, OUT_PAD), lambda i: (i, 0)),
        ),
        compiler_params=pltpu.CompilerParams(
            dimension_semantics=("parallel",),            # megacore on v7x
            vmem_limit_bytes=_vmem_budget_bytes(tb),      # sized to real use
        ),
    )(xp, w1p, b1p, w2p, b2p)

    if return_padded:
        return out_padded          # lane-dense [Bp, 128] block, no extra pass
    return out_padded[:B, :OUTPUT_SIZE]


# --------------------------------------------------------------------------
# Reference + init (PyTorch nn.Linear-style)
# --------------------------------------------------------------------------
def init_params(key):
    """uniform(-1/sqrt(fan_in), 1/sqrt(fan_in)); weights stored as [in, out]."""
    k1, k2, k3, k4 = jax.random.split(key, 4)
    bound1 = 1.0 / math.sqrt(INPUT_SIZE)
    bound2 = 1.0 / math.sqrt(HIDDEN_SIZE)
    w1_t = jax.random.uniform(k1, (INPUT_SIZE, HIDDEN_SIZE), jnp.float32,
                              -bound1, bound1)
    b1 = jax.random.uniform(k2, (1, HIDDEN_SIZE), jnp.float32, -bound1, bound1)
    w2_t = jax.random.uniform(k3, (HIDDEN_SIZE, OUTPUT_SIZE), jnp.float32,
                              -bound2, bound2)
    b2 = jax.random.uniform(k4, (1, OUTPUT_SIZE), jnp.float32, -bound2, bound2)
    return w1_t, b1, w2_t, b2


def dqn_reference(x, w1_t, b1, w2_t, b2):
    h = jnp.maximum(x @ w1_t + b1, 0.0)
    return h @ w2_t + b2


if __name__ == "__main__":
    key = jax.random.PRNGKey(0)
    kp, kx, kx2 = jax.random.split(key, 3)

    w1_t, b1, w2_t, b2 = init_params(kp)
    params = prepare_params(w1_t, b1, w2_t, b2)   # one-time pad/cast, hoisted

    # Small-shape check (the module's natural tiny batch).
    batch = 2
    x = jax.random.normal(kx, (batch, INPUT_SIZE), jnp.float32)
    out = jax.block_until_ready(dqn_forward(x, params))
    ref = dqn_reference(x, w1_t, b1, w2_t, b2)
    assert out.shape == (batch, OUTPUT_SIZE)
    # bf16 operands with f32 accumulation -> loosened tolerance.
    assert jnp.allclose(out, ref, atol=2e-2, rtol=2e-2)

    # Multi-tile check: non-multiple-of-tile batch exercises padding + the
    # >=2-tile grid path (both TensorCores on v7x).
    batch2 = 300
    x2 = jax.random.normal(kx2, (batch2, INPUT_SIZE), jnp.float32)
    out2 = jax.block_until_ready(dqn_forward(x2, params))
    ref2 = dqn_reference(x2, w1_t, b1, w2_t, b2)
    assert out2.shape == (batch2, OUTPUT_SIZE)
    assert jnp.allclose(out2, ref2, atol=2e-2, rtol=2e-2)

    print("KERNEL_OK")
</pallas_src>

<mosaic_0001>
module attributes {stable_mosaic.version = 11 : i64} {
  func.func @dqn_kernel(%arg0: i32, %arg1: memref<8x132xf32, #tpu.memory_space<vmem>>, %arg2: memref<132x256xbf16, #tpu.memory_space<vmem>>, %arg3: memref<1x256xf32, #tpu.memory_space<vmem>>, %arg4: memref<256x128xbf16, #tpu.memory_space<vmem>>, %arg5: memref<1x128xf32, #tpu.memory_space<vmem>>, %arg6: memref<8x128xf32, #tpu.memory_space<vmem>>) attributes {dimension_semantics = [#tpu.dimension_semantics<parallel>], iteration_bounds = array<i64: 1>, scalar_prefetch = 0 : i64, scratch_operands = 0 : i64, tpu.core_type = #tpu.core_type<tc>, window_params = [{transform_indices = @transform_0, window_bounds = array<i64: 8, 132>}, {pipeline_mode = #tpu.pipeline_mode<synchronous>, transform_indices = @transform_1, window_bounds = array<i64: 132, 256>}, {pipeline_mode = #tpu.pipeline_mode<synchronous>, transform_indices = @transform_2, window_bounds = array<i64: 1, 256>}, {pipeline_mode = #tpu.pipeline_mode<synchronous>, transform_indices = @transform_3, window_bounds = array<i64: 256, 128>}, {pipeline_mode = #tpu.pipeline_mode<synchronous>, transform_indices = @transform_4, window_bounds = array<i64: 1, 128>}, {transform_indices = @transform_5, window_bounds = array<i64: 8, 128>}]} {
    %c0 = arith.constant 0 : index
    %c0_0 = arith.constant 0 : index
    %0 = vector.load %arg1[%c0, %c0_0] : memref<8x132xf32, #tpu.memory_space<vmem>>, vector<8x132xf32>
    %1 = arith.truncf %0 : vector<8x132xf32> to vector<8x132xbf16>
    %c0_1 = arith.constant 0 : index
    %c0_2 = arith.constant 0 : index
    %2 = vector.load %arg2[%c0_1, %c0_2] : memref<132x256xbf16, #tpu.memory_space<vmem>>, vector<132x256xbf16>
    %cst = arith.constant dense<0.000000e+00> : vector<8x256xf32>
    %3 = tpu.matmul %1, %2, %cst {dimension_numbers = #tpu.dot_dimension_numbers<[1], [0], [0], [1], [0, 0, 1, 1], [], []>} : vector<8x132xbf16>, vector<132x256xbf16>, vector<8x256xf32> -> vector<8x256xf32>
    %c0_3 = arith.constant 0 : index
    %c0_4 = arith.constant 0 : index
    %4 = vector.load %arg3[%c0_3, %c0_4] : memref<1x256xf32, #tpu.memory_space<vmem>>, vector<1x256xf32>
    %5 = vector.broadcast %4 : vector<1x256xf32> to vector<8x256xf32>
    %6 = arith.addf %3, %5 : vector<8x256xf32>
    %cst_5 = arith.constant 0.000000e+00 : f32
    %7 = vector.broadcast %cst_5 : f32 to vector<8x256xf32>
    %8 = arith.maximumf %6, %7 : vector<8x256xf32>
    %9 = arith.truncf %8 : vector<8x256xf32> to vector<8x256xbf16>
    %c0_6 = arith.constant 0 : index
    %c0_7 = arith.constant 0 : index
    %10 = vector.load %arg4[%c0_6, %c0_7] : memref<256x128xbf16, #tpu.memory_space<vmem>>, vector<256x128xbf16>
    %cst_8 = arith.constant dense<0.000000e+00> : vector<8x128xf32>
    %11 = tpu.matmul %9, %10, %cst_8 {dimension_numbers = #tpu.dot_dimension_numbers<[1], [0], [0], [1], [0, 0, 1, 1], [], []>} : vector<8x256xbf16>, vector<256x128xbf16>, vector<8x128xf32> -> vector<8x128xf32>
    %c0_9 = arith.constant 0 : index
    %c0_10 = arith.constant 0 : index
    %12 = vector.load %arg5[%c0_9, %c0_10] : memref<1x128xf32, #tpu.memory_space<vmem>>, vector<1x128xf32>
    %13 = vector.broadcast %12 : vector<1x128xf32> to vector<8x128xf32>
    %14 = arith.addf %11, %13 : vector<8x128xf32>
    %c0_11 = arith.constant 0 : index
    %c0_12 = arith.constant 0 : index
    %15 = vector.load %arg6[%c0_11, %c0_12] : memref<8x128xf32, #tpu.memory_space<vmem>>, vector<8x128xf32>
    tpu.vector_store %arg6[%c0_11, %c0_12], %14 {strides = array<i32>} : memref<8x128xf32, #tpu.memory_space<vmem>>, vector<8x128xf32>,
    return
  }
  func.func @transform_0(%arg0: i32) -> (i32, i32) {
    %c0_i32 = arith.constant 0 : i32
    %c0_i32_0 = arith.constant 0 : i32
    return %arg0, %c0_i32 : i32, i32
  }
  func.func @transform_1(%arg0: i32) -> (i32, i32) {
    %c0_i32 = arith.constant 0 : i32
    %c0_i32_0 = arith.constant 0 : i32
    %c0_i32_1 = arith.constant 0 : i32
    return %c0_i32, %c0_i32_0 : i32, i32
  }
  func.func @transform_2(%arg0: i32) -> (i32, i32) {
    %c0_i32 = arith.constant 0 : i32
    %c0_i32_0 = arith.constant 0 : i32
    %c0_i32_1 = arith.constant 0 : i32
    return %c0_i32, %c0_i32_0 : i32, i32
  }
  func.func @transform_3(%arg0: i32) -> (i32, i32) {
    %c0_i32 = arith.constant 0 : i32
    %c0_i32_0 = arith.constant 0 : i32
    %c0_i32_1 = arith.constant 0 : i32
    return %c0_i32, %c0_i32_0 : i32, i32
  }
  func.func @transform_4(%arg0: i32) -> (i32, i32) {
    %c0_i32 = arith.constant 0 : i32
    %c0_i32_0 = arith.constant 0 : i32
    %c0_i32_1 = arith.constant 0 : i32
    return %c0_i32, %c0_i32_0 : i32, i32
  }
  func.func @transform_5(%arg0: i32) -> (i32, i32) {
    %c0_i32 = arith.constant 0 : i32
    %c0_i32_0 = arith.constant 0 : i32
    return %arg0, %c0_i32 : i32, i32
  }
}

</mosaic_0001>

<llo_original>
// kernel: tpu_custom_call.1
$region0: #{tpu_custom_call.1}
  #allocation0 [shape = 'u32[]', space=smem, size = 0x4, offset = 0x4, fixed_abs, tag = 'smem constant byte address 0x4 - core index']
  #allocation1 [shape = 'u32[72,128]{1,0:T(1,128)}', space=vmem, size = 0x9000, scoped, tag = 'internal scratch']
  %s0 = inlined_call_operand.hbm [shape: f32[8,132], index: 0, kind: input, shape index: {}]
  %s1 = inlined_call_operand.hbm [shape: bf16[132,256], index: 1, kind: input, shape index: {}]
  %s2 = inlined_call_operand.hbm [shape: f32[1,256], index: 2, kind: input, shape index: {}]
  %s3 = inlined_call_operand.hbm [shape: bf16[256,128], index: 3, kind: input, shape index: {}]
  %s4 = inlined_call_operand.vmem [shape: f32[1,128], index: 4, kind: input, shape index: {}]
  %s5 = inlined_call_operand.hbm [shape: f32[8,128], index: 5, kind: output, shape index: {}]
  %s6 = sld [smem:[#allocation0]]
  $region46: #{tpu_custom_call.1} parent=0
    _
  %s8 = ssub.s32 1, %s6
  %s9 = scalar_select 0, %s8, %s6
  $region1: #{tpu_custom_call.1} parent=0
    #allocation2 [shape = 'u8[8192]{0}', space=vmem, size = 0x2000, scoped, tag = 'input window, operand 0, single buffered']
    #allocation3 [shape = 's32[1]{0}', space=sflag, size = 0x4, scoped, tag = 'scoped memory for tpu_custom_call.1']
    #allocation4 [shape = 's32[1]{0}', space=sflag, size = 0x4, scoped, tag = 'scoped memory for tpu_custom_call.1']
    #allocation5 [shape = 'u8[69632]{0}', space=vmem, size = 0x11000, scoped, tag = 'input window, operand 1, single buffered']
    #allocation6 [shape = 's32[1]{0}', space=sflag, size = 0x4, scoped, tag = 'scoped memory for tpu_custom_call.1']
    #allocation7 [shape = 'u8[1024]{0}', space=vmem, size = 0x400, scoped, tag = 'input window, operand 2, single buffered']
    #allocation8 [shape = 'u8[65536]{0}', space=vmem, size = 0x10000, scoped, tag = 'input window, operand 3, single buffered']
    #allocation9 [shape = 's32[1]{0}', space=sflag, size = 0x4, scoped, tag = 'scoped memory for tpu_custom_call.1']
    #allocation10 [shape = 'u8[4096]{0}', space=vmem, size = 0x1000, scoped, tag = 'output window, operand 0, single buffered']
    %10 = vsyncpa [#allocation3], 0
    %11 = vsyncpa [#allocation6], 0
    %12 = vsyncpa [#allocation9], 0
    %13 = vsyncpa [#allocation4], 0
    // Predicated region
    $region2: #{tpu_custom_call.1} parent=1 // pred_check
      _
    $region3: #{tpu_custom_call.1} parent=1 // pred_check_branch
      %15 = sbr.rel (0) target = $region5
    $region4: #{tpu_custom_call.1} parent=1 // pred_region
      %17 = vsyncadd [#allocation3], 0
      %s19 = sshll.u32 %s0, 4
      %s20 = int_to_ptr.hbm [resolvable:$true] %s19
      %s21 = sshll.u32 [#allocation2], 4
      %s22 = int_to_ptr.vmem [resolvable:$true] %s21
      %24 = dma.hbm_to_vmem [thread:$0]  %s20, 256, %s22, [#allocation3]
    $region5: #{tpu_custom_call.1} parent=1 // pred_fallthru
      _
    // Predicated region
    $region6: #{tpu_custom_call.1} parent=1 // pred_check
      _
    $region7: #{tpu_custom_call.1} parent=1 // pred_check_branch
      %26 = sbr.rel (0) target = $region9
    $region8: #{tpu_custom_call.1} parent=1 // pred_region
      %28 = vsyncadd [#allocation6], 0
      %s29 = sshll.u32 %s1, 4
      %s30 = int_to_ptr.hbm [resolvable:$true] %s29
      %s31 = sshll.u32 [#allocation5], 4
      %s32 = int_to_ptr.vmem [resolvable:$true] %s31
      %37 = dma.hbm_to_vmem [thread:$0]  %s30, 2176, %s32, [#allocation6], 128, 128, 8
    $region9: #{tpu_custom_call.1} parent=1 // pred_fallthru
      _
    // Predicated region
    $region10: #{tpu_custom_call.1} parent=1 // pred_check
      _
    $region11: #{tpu_custom_call.1} parent=1 // pred_check_branch
      %39 = sbr.rel (0) target = $region13
    $region12: #{tpu_custom_call.1} parent=1 // pred_region
      %41 = vsyncadd [#allocation6], 0
      %s43 = sshll.u32 %s2, 4
      %s44 = int_to_ptr.hbm [resolvable:$true] %s43
      %s45 = sshll.u32 [#allocation7], 4
      %s46 = int_to_ptr.vmem [resolvable:$true] %s45
      %48 = dma.hbm_to_vmem [thread:$0]  %s44, 32, %s46, [#allocation6]
    $region13: #{tpu_custom_call.1} parent=1 // pred_fallthru
      _
    // Predicated region
    $region14: #{tpu_custom_call.1} parent=1 // pred_check
      _
    $region15: #{tpu_custom_call.1} parent=1 // pred_check_branch
      %50 = sbr.rel (0) target = $region17
    $region16: #{tpu_custom_call.1} parent=1 // pred_region
      %52 = vsyncadd [#allocation9], 0
      %s53 = sshll.u32 %s3, 4
      %s54 = int_to_ptr.hbm [resolvable:$true] %s53
      %s55 = sshll.u32 [#allocation8], 4
      %s56 = int_to_ptr.vmem [resolvable:$true] %s55
      %61 = dma.hbm_to_vmem [thread:$0]  %s54, 2048, %s56, [#allocation9], 64, 64, 4
    $region17: #{tpu_custom_call.1} parent=1 // pred_fallthru
      _
    // Predicated region
    $region18: #{tpu_custom_call.1} parent=1 // pred_check
      _
    $region19: #{tpu_custom_call.1} parent=1 // pred_check_branch
      %63 = sbr.rel (0) target = $region21
    $region20: #{tpu_custom_call.1} parent=1 // pred_region
      _
    $region21: #{tpu_custom_call.1} parent=1 // pred_fallthru
      _
    // Predicated region
    $region22: #{tpu_custom_call.1} parent=1 // pred_check
      _
    $region23: #{tpu_custom_call.1} parent=1 // pred_check_branch
      %65 = sbr.rel (0) target = $region25
    $region24: #{tpu_custom_call.1} parent=1 // pred_region
      %67 = dma.done [#allocation3], 256
    $region25: #{tpu_custom_call.1} parent=1 // pred_fallthru
      _
    // Predicated region
    $region26: #{tpu_custom_call.1} parent=1 // pred_check
      _
    $region27: #{tpu_custom_call.1} parent=1 // pred_check_branch
      %69 = sbr.rel (0) target = $region29
    $region28: #{tpu_custom_call.1} parent=1 // pred_region
      %71 = dma.done [#allocation6], 2176
    $region29: #{tpu_custom_call.1} parent=1 // pred_fallthru
      _
    // Predicated region
    $region30: #{tpu_custom_call.1} parent=1 // pred_check
      _
    $region31: #{tpu_custom_call.1} parent=1 // pred_check_branch
      %73 = sbr.rel (0) target = $region33
    $region32: #{tpu_custom_call.1} parent=1 // pred_region
      %75 = dma.done [#allocation6], 32
    $region33: #{tpu_custom_call.1} parent=1 // pred_fallthru
      _
    // Predicated region
    $region34: #{tpu_custom_call.1} parent=1 // pred_check
      _
    $region35: #{tpu_custom_call.1} parent=1 // pred_check_branch
      %77 = sbr.rel (0) target = $region37
    $region36: #{tpu_custom_call.1} parent=1 // pred_region
      %79 = dma.done [#allocation9], 2048
    $region37: #{tpu_custom_call.1} parent=1 // pred_fallthru
      _
    %v81 = vld [vmem:[#allocation2] sm:$0xff]
    %v82 = vld [vmem:[#allocation2 + $0x8] sm:$0xff]
    %v83 = vpack.c.bf16 %v81, %v81
    %v84 = vpack.c.bf16 %v82, %v82
    %v85 = vld [vmem:[#allocation5] sm:$0xff]
    %v86 = vld [vmem:[#allocation5 + $0x8] sm:$0xff]
    %v87 = vld [vmem:[#allocation5 + $0x10] sm:$0xff]
    %v88 = vld [vmem:[#allocation5 + $0x18] sm:$0xff]
    %v89 = vld [vmem:[#allocation5 + $0x20] sm:$0xff]
    %v90 = vld [vmem:[#allocation5 + $0x28] sm:$0xff]
    %v91 = vld [vmem:[#allocation5 + $0x30] sm:$0xff]
    %v92 = vld [vmem:[#allocation5 + $0x38] sm:$0xff]
    %v93 = vld [vmem:[#allocation5 + $0x40] sm:$0xff]
    %v94 = vld [vmem:[#allocation5 + $0x48] sm:$0xff]
    %v95 = vld [vmem:[#allocation5 + $0x50] sm:$0xff]
    %v96 = vld [vmem:[#allocation5 + $0x58] sm:$0xff]
    %v97 = vld [vmem:[#allocation5 + $0x60] sm:$0xff]
    %v98 = vld [vmem:[#allocation5 + $0x68] sm:$0xff]
    %v99 = vld [vmem:[#allocation5 + $0x70] sm:$0xff]
    %v100 = vld [vmem:[#allocation5 + $0x78] sm:$0xff]
    %v101 = vld [vmem:[#allocation5 + $0x80] sm:$0x33]
    %v102 = vld [vmem:[#allocation7] sm:$0x3]
    %v104 = vperm.slane %v102, 0
    %v105 = vperm.slane %v102, 1
    %v125 = vunpack.c.l.b16 %v85
    %v126 = vunpack.c.h.b16 %v85
    %v127 = vunpack.c.l.b16 %v86
    %v128 = vunpack.c.h.b16 %v86
    %v129 = vunpack.c.l.b16 %v87
    %v130 = vunpack.c.h.b16 %v87
    %v131 = vunpack.c.l.b16 %v88
    %v132 = vunpack.c.h.b16 %v88
    %v133 = vunpack.c.l.b16 %v89
    %v134 = vunpack.c.h.b16 %v89
    %v135 = vunpack.c.l.b16 %v90
    %v136 = vunpack.c.h.b16 %v90
    %v137 = vunpack.c.l.b16 %v91
    %v138 = vunpack.c.h.b16 %v91
    %v139 = vunpack.c.l.b16 %v92
    %v140 = vunpack.c.h.b16 %v92
    %v141 = vunpack.c.l.b16 %v93
    %v142 = vunpack.c.h.b16 %v93
    %v143 = vunpack.c.l.b16 %v94
    %v144 = vunpack.c.h.b16 %v94
    %v145 = vunpack.c.l.b16 %v95
    %v146 = vunpack.c.h.b16 %v95
    %v147 = vunpack.c.l.b16 %v96
    %v148 = vunpack.c.h.b16 %v96
    %v149 = vunpack.c.l.b16 %v97
    %v150 = vunpack.c.h.b16 %v97
    %v151 = vunpack.c.l.b16 %v98
    %v152 = vunpack.c.h.b16 %v98
    %v153 = vunpack.c.l.b16 %v99
    %v154 = vunpack.c.h.b16 %v99
    %v155 = vunpack.c.l.b16 %v100
    %v156 = vunpack.c.h.b16 %v100
    %v157 = vunpack.c.l.b16 %v101
    %v158 = vunpack.c.h.b16 %v101
    %v159 = vpack.c.b16 %v127, %v125
    %v160 = vpack.c.b16 %v128, %v126
    %v161 = vpack.c.b16 %v131, %v129
    %v162 = vpack.c.b16 %v132, %v130
    %v163 = vpack.c.b16 %v135, %v133
    %v164 = vpack.c.b16 %v136, %v134
    %v165 = vpack.c.b16 %v139, %v137
    %v166 = vpack.c.b16 %v140, %v138
    %v167 = vpack.c.b16 %v143, %v141
    %v168 = vpack.c.b16 %v144, %v142
    %v169 = vpack.c.b16 %v147, %v145
    %v170 = vpack.c.b16 %v148, %v146
    %v171 = vpack.c.b16 %v151, %v149
    %v172 = vpack.c.b16 %v152, %v150
    %v173 = vpack.c.b16 %v155, %v153
    %v174 = vpack.c.b16 %v156, %v154
    %v175 = vpack.c.b16 %v157, %v157
    %v176 = vpack.c.b16 %v158, %v158
    %vm193 = vcmask 31744
    %v195 = vsel %vm193, %v84, 0
    %vm197 = vcmask 1041408
    %v199 = vsel %vm197, %v175, 0
    %v202 = vsel %vm197, %v176, 0
    %204 = vmatpush.bf16.msra.mxu0 %v173
    %205 = vmatpush.bf16.msra.mxu0 %v171
    %206 = vmatpush.bf16.msra.mxu0 %v169
    %207 = vmatpush.bf16.msra.mxu0 %v167
    %208 = vmatpush.bf16.msra.mxu0 %v165
    %209 = vmatpush.bf16.msra.mxu0 %v163
    %210 = vmatpush.bf16.msra.mxu0 %v161
    %211 = vmatpush.bf16.msra.mxu0 %v159
    %212 = vmatmul.bf16.gmra.mxu0 %v83
    %v213 = vpop.f32.mrf.mxu0
    %v214 = vadd.f32 %v104, %v213
    %v215 = vpop.f32.mrf.mxu0
    %216 = vdwg.mxu0
    %217 = vmatpush.bf16.msra.mxu0 0
    %218 = vmatpush.bf16.msra.mxu0 0
    %219 = vmatpush.bf16.msra.mxu0 0
    %220 = vmatpush.bf16.msra.mxu0 0
    %221 = vmatpush.bf16.msra.mxu0 0
    %222 = vmatpush.bf16.msra.mxu0 0
    %223 = vmatpush.bf16.msra.mxu0 0
    %224 = vmatpush.bf16.msra.mxu0 %v199
    %225 = vmatmul.bf16.gmra.mxu0 %v195
    %v226 = vpop.f32.mrf.mxu0
    %v227 = vadd.f32 %v214, %v226
    %v228 = vpop.f32.mrf.mxu0
    %229 = vdwg.mxu0
    %230 = vmatpush.bf16.msra.mxu0 %v174
    %231 = vmatpush.bf16.msra.mxu0 %v172
    %232 = vmatpush.bf16.msra.mxu0 %v170
    %233 = vmatpush.bf16.msra.mxu0 %v168
    %234 = vmatpush.bf16.msra.mxu0 %v166
    %235 = vmatpush.bf16.msra.mxu0 %v164
    %236 = vmatpush.bf16.msra.mxu0 %v162
    %237 = vmatpush.bf16.msra.mxu0 %v160
    %238 = vmatmul.bf16.gmra.mxu0 %v83
    %v239 = vpop.f32.mrf.mxu0
    %v240 = vadd.f32 %v105, %v239
    %v241 = vpop.f32.mrf.mxu0
    %242 = vdwg.mxu0
    %243 = vmatpush.bf16.msra.mxu0 0
    %244 = vmatpush.bf16.msra.mxu0 0
    %245 = vmatpush.bf16.msra.mxu0 0
    %246 = vmatpush.bf16.msra.mxu0 0
    %247 = vmatpush.bf16.msra.mxu0 0
    %248 = vmatpush.bf16.msra.mxu0 0
    %249 = vmatpush.bf16.msra.mxu0 0
    %250 = vmatpush.bf16.msra.mxu0 %v202
    %251 = vmatmul.bf16.gmra.mxu0 %v195
    %v252 = vpop.f32.mrf.mxu0
    %v253 = vadd.f32 %v240, %v252
    %v254 = vpop.f32.mrf.mxu0
    %255 = vdwg.mxu0
    %v256 = vmax.f32 %v227, 0.0
    %v257 = vmax.f32 %v253, 0.0
    %v258 = vpack.c.bf16 %v256, %v256
    %v259 = vpack.c.bf16 %v257, %v257
    %v260 = vld [vmem:[#allocation8] sm:$0xf]
    %v261 = vld [vmem:[#allocation8 + $0x4] sm:$0xf]
    %v262 = vld [vmem:[#allocation8 + $0x8] sm:$0xf]
    %v263 = vld [vmem:[#allocation8 + $0xc] sm:$0xf]
    %v264 = vld [vmem:[#allocation8 + $0x10] sm:$0xf]
    %v265 = vld [vmem:[#allocation8 + $0x14] sm:$0xf]
    %v266 = vld [vmem:[#allocation8 + $0x18] sm:$0xf]
    %v267 = vld [vmem:[#allocation8 + $0x1c] sm:$0xf]
    %v268 = vld [vmem:[#allocation8 + $0x20] sm:$0xf]
    %v269 = vld [vmem:[#allocation8 + $0x24] sm:$0xf]
    %v270 = vld [vmem:[#allocation8 + $0x28] sm:$0xf]
    %v271 = vld [vmem:[#allocation8 + $0x2c] sm:$0xf]
    %v272 = vld [vmem:[#allocation8 + $0x30] sm:$0xf]
    %v273 = vld [vmem:[#allocation8 + $0x34] sm:$0xf]
    %v274 = vld [vmem:[#allocation8 + $0x38] sm:$0xf]
    %v275 = vld [vmem:[#allocation8 + $0x3c] sm:$0xf]
    %v276 = vld [vmem:[#allocation8 + $0x40] sm:$0xf]
    %v277 = vld [vmem:[#allocation8 + $0x44] sm:$0xf]
    %v278 = vld [vmem:[#allocation8 + $0x48] sm:$0xf]
    %v279 = vld [vmem:[#allocation8 + $0x4c] sm:$0xf]
    %v280 = vld [vmem:[#allocation8 + $0x50] sm:$0xf]
    %v281 = vld [vmem:[#allocation8 + $0x54] sm:$0xf]
    %v282 = vld [vmem:[#allocation8 + $0x58] sm:$0xf]
    %v283 = vld [vmem:[#allocation8 + $0x5c] sm:$0xf]
    %v284 = vld [vmem:[#allocation8 + $0x60] sm:$0xf]
    %v285 = vld [vmem:[#allocation8 + $0x64] sm:$0xf]
    %v286 = vld [vmem:[#allocation8 + $0x68] sm:$0xf]
    %v287 = vld [vmem:[#allocation8 + $0x6c] sm:$0xf]
    %v288 = vld [vmem:[#allocation8 + $0x70] sm:$0xf]
    %v289 = vld [vmem:[#allocation8 + $0x74] sm:$0xf]
    %v290 = vld [vmem:[#allocation8 + $0x78] sm:$0xf]
    %v291 = vld [vmem:[#allocation8 + $0x7c] sm:$0xf]
    %v292 = vld [vmem:[%s4] sm:$0x1]
    %v294 = vperm.slane %v292, 0
    %v328 = vunpack.c.l.b16 %v260
    %v329 = vunpack.c.l.b16 %v261
    %v330 = vunpack.c.l.b16 %v262
    %v331 = vunpack.c.l.b16 %v263
    %v332 = vunpack.c.l.b16 %v264
    %v333 = vunpack.c.l.b16 %v265
    %v334 = vunpack.c.l.b16 %v266
    %v335 = vunpack.c.l.b16 %v267
    %v336 = vunpack.c.l.b16 %v268
    %v337 = vunpack.c.l.b16 %v269
    %v338 = vunpack.c.l.b16 %v270
    %v339 = vunpack.c.l.b16 %v271
    %v340 = vunpack.c.l.b16 %v272
    %v341 = vunpack.c.l.b16 %v273
    %v342 = vunpack.c.l.b16 %v274
    %v343 = vunpack.c.l.b16 %v275
    %v344 = vunpack.c.l.b16 %v276
    %v345 = vunpack.c.l.b16 %v277
    %v346 = vunpack.c.l.b16 %v278
    %v347 = vunpack.c.l.b16 %v279
    %v348 = vunpack.c.l.b16 %v280
    %v349 = vunpack.c.l.b16 %v281
    %v350 = vunpack.c.l.b16 %v282
    %v351 = vunpack.c.l.b16 %v283
    %v352 = vunpack.c.l.b16 %v284
    %v353 = vunpack.c.l.b16 %v285
    %v354 = vunpack.c.l.b16 %v286
    %v355 = vunpack.c.l.b16 %v287
    %v356 = vunpack.c.l.b16 %v288
    %v357 = vunpack.c.l.b16 %v289
    %v358 = vunpack.c.l.b16 %v290
    %v359 = vunpack.c.l.b16 %v291
    %v360 = vpack.c.b16 %v329, %v328
    %v361 = vpack.c.b16 %v331, %v330
    %v362 = vpack.c.b16 %v333, %v332
    %v363 = vpack.c.b16 %v335, %v334
    %v364 = vpack.c.b16 %v337, %v336
    %v365 = vpack.c.b16 %v339, %v338
    %v366 = vpack.c.b16 %v341, %v340
    %v367 = vpack.c.b16 %v343, %v342
    %v368 = vpack.c.b16 %v345, %v344
    %v369 = vpack.c.b16 %v347, %v346
    %v370 = vpack.c.b16 %v349, %v348
    %v371 = vpack.c.b16 %v351, %v350
    %v372 = vpack.c.b16 %v353, %v352
    %v373 = vpack.c.b16 %v355, %v354
    %v374 = vpack.c.b16 %v357, %v356
    %v375 = vpack.c.b16 %v359, %v358
    %392 = vmatpush.bf16.msra.mxu0 %v367
    %393 = vmatpush.bf16.msra.mxu0 %v366
    %394 = vmatpush.bf16.msra.mxu0 %v365
    %395 = vmatpush.bf16.msra.mxu0 %v364
    %396 = vmatpush.bf16.msra.mxu0 %v363
    %397 = vmatpush.bf16.msra.mxu0 %v362
    %398 = vmatpush.bf16.msra.mxu0 %v361
    %399 = vmatpush.bf16.msra.mxu0 %v360
    %400 = vmatmul.bf16.gmra.mxu0 %v258
    %v401 = vpop.f32.mrf.mxu0
    %v402 = vadd.f32 %v294, %v401
    %v403 = vpop.f32.mrf.mxu0
    %404 = vdwg.mxu0
    %405 = vmatpush.bf16.msra.mxu0 %v375
    %406 = vmatpush.bf16.msra.mxu0 %v374
    %407 = vmatpush.bf16.msra.mxu0 %v373
    %408 = vmatpush.bf16.msra.mxu0 %v372
    %409 = vmatpush.bf16.msra.mxu0 %v371
    %410 = vmatpush.bf16.msra.mxu0 %v370
    %411 = vmatpush.bf16.msra.mxu0 %v369
    %412 = vmatpush.bf16.msra.mxu0 %v368
    %413 = vmatmul.bf16.gmra.mxu0 %v259
    %v414 = vpop.f32.mrf.mxu0
    %v415 = vadd.f32 %v402, %v414
    %v416 = vpop.f32.mrf.mxu0
    %417 = vdwg.mxu0
    %418 = vst [vmem:[#allocation10] sm:$0xff] %v415
    // Predicated region
    $region38: #{tpu_custom_call.1} parent=1 // pred_check
      _
    $region39: #{tpu_custom_call.1} parent=1 // pred_check_branch
      %420 = sbr.rel (0) target = $region41
    $region40: #{tpu_custom_call.1} parent=1 // pred_region
      %422 = vsyncadd [#allocation4], 0
      %s424 = sshll.u32 [#allocation10], 4
      %s425 = int_to_ptr.vmem [resolvable:$true] %s424
      %s426 = sshll.u32 %s5, 4
      %s427 = int_to_ptr.hbm [resolvable:$true] %s426
      %429 = dma.vmem_to_hbm [thread:$0]  %s425, 128, %s427, [#allocation4]
    $region41: #{tpu_custom_call.1} parent=1 // pred_fallthru
      _
    // Predicated region
    $region42: #{tpu_custom_call.1} parent=1 // pred_check
      _
    $region43: #{tpu_custom_call.1} parent=1 // pred_check_branch
      %431 = sbr.rel (0) target = $region45
    $region44: #{tpu_custom_call.1} parent=1 // pred_region
      %433 = dma.done [#allocation4], 128
    $region45: #{tpu_custom_call.1} parent=1 // pred_fallthru
      _
    %434 = vsyncpa [#allocation3], 1
    %435 = vsyncpa [#allocation6], 1
    %436 = vsyncpa [#allocation9], 1
    %437 = vsyncpa [#allocation4], 1

</llo_original>
